<compile_context>
chip_gen: v5e
topology: v5e:2x2
jax: 0.10.0
libtpu: 0.0.40
codegen_flags: <defaults>
</compile_context>

<pallas_src>
import math
from functools import partial

import numpy as np
import jax
import jax.numpy as jnp
from jax.experimental import pallas as pl

# ---- problem sizes implied by the script around the module -----------------
BATCH = 2          # torch.stack((inputs, inputs), dim=0)
SEQ = 6            # inputs has 6 rows -> context_length = 6
D_IN = 3           # inputs has 3 columns
D_OUT = 2          # d_out = 2
NUM_HEADS = 2      # d_out % num_heads == 0 -> head_dim = 1
HEAD_DIM = D_OUT // NUM_HEADS
DROPOUT_P = 0.0    # TODO(synk): nn.Dropout(p=0.0) / eval mode is identity; not applied.


def _mha_kernel(xf_ref, xt_ref, wqt_ref, wkv_ref, wot_ref, bo_ref, bias_ref,
                o_ref, *, num_heads):
    # xf_ref   : (n, d_in)        flattened input rows (batch folded into rows)
    # xt_ref   : (d_in, n)        pre-transposed input (wrapper-side, free)
    # wqt_ref  : (d_in, d_out)    W_query^T with 1/sqrt(head_dim) folded in
    # wkv_ref  : (2*d_out, d_in)  [W_key; W_value] stacked (row-major, as in torch)
    # wot_ref  : (d_out, d_out)   out_proj weight, pre-transposed
    # bo_ref   : (1, d_out)       out_proj bias
    # bias_ref : (n, n)           additive block-diagonal causal mask (0 / -1e30)
    # o_ref    : (n, d_out)
    #
    # NOTE: specialized to head_dim == 1 (d_out=2, num_heads=2 as in the script),
    # so each head's Q is one column of `q` and each head's K^T / V^T is one row
    # of `kvt`.
    d_out = wot_ref.shape[0]

    # Q for all rows / heads: one MXU push (attention scale already folded in).
    q = jnp.dot(xf_ref[...], wqt_ref[...],
                preferred_element_type=jnp.float32)               # (n, d_out)

    # K^T and V^T for all rows / heads: one MXU push, no in-kernel transposes.
    kvt = jnp.dot(wkv_ref[...], xt_ref[...],
                  preferred_element_type=jnp.float32)             # (2*d_out, n)
    kt = kvt[:d_out, :]                                           # (H, n)
    vt = kvt[d_out:, :]                                           # (H, n)

    bias = bias_ref[...]                                          # (n, n)

    out = bo_ref[...]                                             # (1, d_out) -> broadcasts
    for h in range(num_heads):                                    # static (num_heads == 2)
        # Outer-product scores on the VPU: (n,1) * (1,n) broadcast multiply.
        s = q[:, h:h + 1] * kt[h:h + 1, :]                        # (n, n)
        s = s + bias                                              # block-diag causal mask

        # Numerically-stable softmax over keys, exact divide.
        m = jnp.max(s, axis=-1, keepdims=True)
        p = jnp.exp(s - m)
        w = p / jnp.sum(p, axis=-1, keepdims=True)                # (n, n)

        # Context for this head: lane reduce instead of a width-1 MXU matmul.
        ctx_h = jnp.sum(w * vt[h:h + 1, :], axis=-1, keepdims=True)   # (n, 1)

        # Output projection folded in as a broadcast MAC (no concat, no 2x2 matmul).
        out = out + ctx_h * wot_ref[h:h + 1, :]                   # (n, d_out)

    o_ref[...] = out.astype(o_ref.dtype)


def _causal_block_bias(batch, seq):
    """Additive block-diagonal causal bias over flattened (batch*seq) rows."""
    n = batch * seq
    bias = np.full((n, n), -1e30, dtype=np.float32)
    tril = np.tril(np.ones((seq, seq), dtype=bool))
    for b in range(batch):
        lo = b * seq
        bias[lo:lo + seq, lo:lo + seq] = np.where(tril, 0.0, -1e30)
    return jnp.asarray(bias)


@jax.jit
def multi_head_attention(x, wq, wk, wv, wo, bo):
    b, t, d_in = x.shape
    d_out = wq.shape[0]
    head_dim = d_out // NUM_HEADS
    assert head_dim == 1, "kernel path specialized to head_dim == 1 (d_out=2, num_heads=2)"
    n = b * t
    scale = 1.0 / math.sqrt(head_dim)

    # Wrapper-side layout plumbing (free at trace time):
    #  * fold the 1/sqrt(head_dim) scale into W_query and pre-transpose it,
    #  * stack W_key/W_value so K^T/V^T come out of one matmul against x^T,
    #  * pre-transpose the output projection weight,
    #  * flatten the batch into the row axis (single projection for all rows),
    #  * bake the block-diagonal causal mask into a constant additive bias.
    xf = x.reshape(n, d_in)
    xt = xf.T                                                   # (d_in, n)
    wqt = (wq * scale).T                                        # (d_in, d_out)
    wkv = jnp.concatenate([wk, wv], axis=0)                     # (2*d_out, d_in)
    wot = wo.T                                                  # (d_out, d_out)
    bo2 = bo.reshape(1, d_out)
    bias = _causal_block_bias(b, t)                             # (n, n) constant

    out_flat = pl.pallas_call(
        partial(_mha_kernel, num_heads=NUM_HEADS),
        out_shape=jax.ShapeDtypeStruct((n, d_out), x.dtype),
    )(xf, xt, wqt, wkv, wot, bo2, bias)
    return out_flat.reshape(b, t, d_out)


def _reference(x, wq, wk, wv, wo, bo, num_heads):
    b, t, _ = x.shape
    d_out = wq.shape[0]
    hd = d_out // num_heads

    def proj(w):
        return (x @ w.T).reshape(b, t, num_heads, hd).transpose(0, 2, 1, 3)

    q, k, v = proj(wq), proj(wk), proj(wv)                       # (b, H, T, hd)
    s = jnp.einsum("bhqd,bhkd->bhqk", q, k) / math.sqrt(hd)
    mask = jnp.triu(jnp.ones((t, t), dtype=bool), k=1)
    s = jnp.where(mask, -jnp.inf, s)
    w_attn = jax.nn.softmax(s, axis=-1)
    ctx = jnp.einsum("bhqk,bhkd->bhqd", w_attn, v)
    ctx = ctx.transpose(0, 2, 1, 3).reshape(b, t, d_out)
    return ctx @ wo.T + bo


if __name__ == "__main__":
    # Deterministic "PyTorch-like" parameter init (uniform +/- 1/sqrt(fan_in)).
    key = jax.random.PRNGKey(0)
    _, kq, kk, kv, ko, kb = jax.random.split(key, 6)

    inputs = jnp.array(
        [[0.43, 0.15, 0.89],
         [0.55, 0.87, 0.66],
         [0.57, 0.85, 0.64],
         [0.22, 0.58, 0.33],
         [0.77, 0.25, 0.10],
         [0.05, 0.80, 0.55]], dtype=jnp.float32)
    x = jnp.stack((inputs, inputs), axis=0)                      # (2, 6, 3)

    lim_in = 1.0 / math.sqrt(D_IN)
    lim_out = 1.0 / math.sqrt(D_OUT)
    wq = jax.random.uniform(kq, (D_OUT, D_IN), jnp.float32, -lim_in, lim_in)
    wk = jax.random.uniform(kk, (D_OUT, D_IN), jnp.float32, -lim_in, lim_in)
    wv = jax.random.uniform(kv, (D_OUT, D_IN), jnp.float32, -lim_in, lim_in)
    wo = jax.random.uniform(ko, (D_OUT, D_OUT), jnp.float32, -lim_out, lim_out)
    bo = jax.random.uniform(kb, (D_OUT,), jnp.float32, -lim_out, lim_out)

    out = jax.block_until_ready(multi_head_attention(x, wq, wk, wv, wo, bo))
    ref = _reference(x, wq, wk, wv, wo, bo, NUM_HEADS)

    assert out.shape == (BATCH, SEQ, D_OUT)
    # Exact-divide softmax again -> tight f32 tolerance.
    assert jnp.allclose(out, ref, atol=1e-5, rtol=1e-5), "mismatch vs JAX reference"

    print("KERNEL_OK")
</pallas_src>

<mosaic_0001>
module attributes {stable_mosaic.version = 11 : i64} {
  func.func @_mha_kernel(%arg0: memref<12x3xf32, #tpu.memory_space<vmem>>, %arg1: memref<3x12xf32, #tpu.memory_space<vmem>>, %arg2: memref<3x2xf32, #tpu.memory_space<vmem>>, %arg3: memref<4x3xf32, #tpu.memory_space<vmem>>, %arg4: memref<2x2xf32, #tpu.memory_space<vmem>>, %arg5: memref<1x2xf32, #tpu.memory_space<vmem>>, %arg6: memref<12x12xf32, #tpu.memory_space<vmem>>, %arg7: memref<12x2xf32, #tpu.memory_space<vmem>>) attributes {dimension_semantics = [], scalar_prefetch = 0 : i64, scratch_operands = 0 : i64, tpu.core_type = #tpu.core_type<tc>} {
    %c0 = arith.constant 0 : index
    %c0_0 = arith.constant 0 : index
    %0 = vector.load %arg0[%c0, %c0_0] : memref<12x3xf32, #tpu.memory_space<vmem>>, vector<12x3xf32>
    %c0_1 = arith.constant 0 : index
    %c0_2 = arith.constant 0 : index
    %1 = vector.load %arg2[%c0_1, %c0_2] : memref<3x2xf32, #tpu.memory_space<vmem>>, vector<3x2xf32>
    %cst = arith.constant dense<0.000000e+00> : vector<12x2xf32>
    %2 = tpu.matmul %0, %1, %cst {dimension_numbers = #tpu.dot_dimension_numbers<[1], [0], [0], [1], [0, 0, 1, 1], [], []>} : vector<12x3xf32>, vector<3x2xf32>, vector<12x2xf32> -> vector<12x2xf32>
    %c0_3 = arith.constant 0 : index
    %c0_4 = arith.constant 0 : index
    %3 = vector.load %arg3[%c0_3, %c0_4] : memref<4x3xf32, #tpu.memory_space<vmem>>, vector<4x3xf32>
    %c0_5 = arith.constant 0 : index
    %c0_6 = arith.constant 0 : index
    %4 = vector.load %arg1[%c0_5, %c0_6] : memref<3x12xf32, #tpu.memory_space<vmem>>, vector<3x12xf32>
    %cst_7 = arith.constant dense<0.000000e+00> : vector<4x12xf32>
    %5 = tpu.matmul %3, %4, %cst_7 {dimension_numbers = #tpu.dot_dimension_numbers<[1], [0], [0], [1], [0, 0, 1, 1], [], []>} : vector<4x3xf32>, vector<3x12xf32>, vector<4x12xf32> -> vector<4x12xf32>
    %6 = vector.extract_strided_slice %5 {offsets = [0, 0], sizes = [2, 12], strides = [1, 1]} : vector<4x12xf32> to vector<2x12xf32>
    %7 = vector.extract_strided_slice %5 {offsets = [2, 0], sizes = [2, 12], strides = [1, 1]} : vector<4x12xf32> to vector<2x12xf32>
    %c0_8 = arith.constant 0 : index
    %c0_9 = arith.constant 0 : index
    %8 = vector.load %arg6[%c0_8, %c0_9] : memref<12x12xf32, #tpu.memory_space<vmem>>, vector<12x12xf32>
    %c0_10 = arith.constant 0 : index
    %c0_11 = arith.constant 0 : index
    %9 = vector.load %arg5[%c0_10, %c0_11] : memref<1x2xf32, #tpu.memory_space<vmem>>, vector<1x2xf32>
    %10 = vector.extract_strided_slice %2 {offsets = [0, 0], sizes = [12, 1], strides = [1, 1]} : vector<12x2xf32> to vector<12x1xf32>
    %11 = vector.extract_strided_slice %6 {offsets = [0, 0], sizes = [1, 12], strides = [1, 1]} : vector<2x12xf32> to vector<1x12xf32>
    %12 = vector.broadcast %10 : vector<12x1xf32> to vector<12x12xf32>
    %13 = vector.broadcast %11 : vector<1x12xf32> to vector<12x12xf32>
    %14 = arith.mulf %12, %13 : vector<12x12xf32>
    %15 = arith.addf %14, %8 : vector<12x12xf32>
    %cst_12 = arith.constant dense<0xFF800000> : vector<12xf32>
    %16 = vector.multi_reduction <maximumf>, %15, %cst_12 [1] : vector<12x12xf32> to vector<12xf32>
    %17 = vector.shape_cast %16 : vector<12xf32> to vector<12x1xf32>
    %18 = vector.broadcast %17 : vector<12x1xf32> to vector<12x12xf32>
    %19 = arith.subf %15, %18 : vector<12x12xf32>
    %20 = math.exp %19 : vector<12x12xf32>
    %cst_13 = arith.constant dense<0.000000e+00> : vector<12xf32>
    %21 = vector.multi_reduction <add>, %20, %cst_13 [1] : vector<12x12xf32> to vector<12xf32>
    %22 = vector.shape_cast %21 : vector<12xf32> to vector<12x1xf32>
    %23 = vector.broadcast %22 : vector<12x1xf32> to vector<12x12xf32>
    %24 = arith.divf %20, %23 : vector<12x12xf32>
    %25 = vector.extract_strided_slice %7 {offsets = [0, 0], sizes = [1, 12], strides = [1, 1]} : vector<2x12xf32> to vector<1x12xf32>
    %26 = vector.broadcast %25 : vector<1x12xf32> to vector<12x12xf32>
    %27 = arith.mulf %24, %26 : vector<12x12xf32>
    %cst_14 = arith.constant dense<0.000000e+00> : vector<12xf32>
    %28 = vector.multi_reduction <add>, %27, %cst_14 [1] : vector<12x12xf32> to vector<12xf32>
    %29 = vector.shape_cast %28 : vector<12xf32> to vector<12x1xf32>
    %c0_15 = arith.constant 0 : index
    %c0_16 = arith.constant 0 : index
    %30 = vector.load %arg4[%c0_15, %c0_16] : memref<2x2xf32, #tpu.memory_space<vmem>>, vector<1x2xf32>
    %31 = vector.broadcast %29 : vector<12x1xf32> to vector<12x2xf32>
    %32 = vector.broadcast %30 : vector<1x2xf32> to vector<12x2xf32>
    %33 = arith.mulf %31, %32 : vector<12x2xf32>
    %34 = vector.broadcast %9 : vector<1x2xf32> to vector<12x2xf32>
    %35 = arith.addf %34, %33 : vector<12x2xf32>
    %36 = vector.extract_strided_slice %2 {offsets = [0, 1], sizes = [12, 1], strides = [1, 1]} : vector<12x2xf32> to vector<12x1xf32>
    %37 = vector.extract_strided_slice %6 {offsets = [1, 0], sizes = [1, 12], strides = [1, 1]} : vector<2x12xf32> to vector<1x12xf32>
    %38 = vector.broadcast %36 : vector<12x1xf32> to vector<12x12xf32>
    %39 = vector.broadcast %37 : vector<1x12xf32> to vector<12x12xf32>
    %40 = arith.mulf %38, %39 : vector<12x12xf32>
    %41 = arith.addf %40, %8 : vector<12x12xf32>
    %cst_17 = arith.constant dense<0xFF800000> : vector<12xf32>
    %42 = vector.multi_reduction <maximumf>, %41, %cst_17 [1] : vector<12x12xf32> to vector<12xf32>
    %43 = vector.shape_cast %42 : vector<12xf32> to vector<12x1xf32>
    %44 = vector.broadcast %43 : vector<12x1xf32> to vector<12x12xf32>
    %45 = arith.subf %41, %44 : vector<12x12xf32>
    %46 = math.exp %45 : vector<12x12xf32>
    %cst_18 = arith.constant dense<0.000000e+00> : vector<12xf32>
    %47 = vector.multi_reduction <add>, %46, %cst_18 [1] : vector<12x12xf32> to vector<12xf32>
    %48 = vector.shape_cast %47 : vector<12xf32> to vector<12x1xf32>
    %49 = vector.broadcast %48 : vector<12x1xf32> to vector<12x12xf32>
    %50 = arith.divf %46, %49 : vector<12x12xf32>
    %51 = vector.extract_strided_slice %7 {offsets = [1, 0], sizes = [1, 12], strides = [1, 1]} : vector<2x12xf32> to vector<1x12xf32>
    %52 = vector.broadcast %51 : vector<1x12xf32> to vector<12x12xf32>
    %53 = arith.mulf %50, %52 : vector<12x12xf32>
    %cst_19 = arith.constant dense<0.000000e+00> : vector<12xf32>
    %54 = vector.multi_reduction <add>, %53, %cst_19 [1] : vector<12x12xf32> to vector<12xf32>
    %55 = vector.shape_cast %54 : vector<12xf32> to vector<12x1xf32>
    %c1 = arith.constant 1 : index
    %c0_20 = arith.constant 0 : index
    %56 = vector.load %arg4[%c1, %c0_20] : memref<2x2xf32, #tpu.memory_space<vmem>>, vector<1x2xf32>
    %57 = vector.broadcast %55 : vector<12x1xf32> to vector<12x2xf32>
    %58 = vector.broadcast %56 : vector<1x2xf32> to vector<12x2xf32>
    %59 = arith.mulf %57, %58 : vector<12x2xf32>
    %60 = arith.addf %35, %59 : vector<12x2xf32>
    %c0_21 = arith.constant 0 : index
    %c0_22 = arith.constant 0 : index
    %61 = vector.load %arg7[%c0_21, %c0_22] : memref<12x2xf32, #tpu.memory_space<vmem>>, vector<12x2xf32>
    tpu.vector_store %arg7[%c0_21, %c0_22], %60 {strides = array<i32>} : memref<12x2xf32, #tpu.memory_space<vmem>>, vector<12x2xf32>,
    return
  }
}

</mosaic_0001>

<llo_original>
// kernel: multi_head_attention.1
$region0: #{multi_head_attention.1}
  #allocation0 [shape = 'u32[]', space=smem, size = 0x4, offset = 0x4, fixed_abs, tag = 'smem constant byte address 0x4 - core index']
  #allocation1 [shape = 'u32[72,128]{1,0:T(1,128)}', space=vmem, size = 0x9000, scoped, tag = 'internal scratch']
  %s0 = inlined_call_operand.vmem [shape: f32[12,3], index: 0, kind: input, shape index: {}]
  %s1 = inlined_call_operand.vmem [shape: f32[3,12], index: 1, kind: input, shape index: {}]
  %s2 = inlined_call_operand.vmem [shape: f32[3,2], index: 2, kind: input, shape index: {}]
  %s3 = inlined_call_operand.vmem [shape: f32[4,3], index: 3, kind: input, shape index: {}]
  %s4 = inlined_call_operand.vmem [shape: f32[2,2], index: 4, kind: input, shape index: {}]
  %s5 = inlined_call_operand.vmem [shape: f32[1,2], index: 5, kind: input, shape index: {}]
  %s6 = inlined_call_operand.vmem [shape: f32[12,12], index: 6, kind: input, shape index: {}]
  %s7 = inlined_call_operand.vmem [shape: f32[12,2], index: 7, kind: output, shape index: {}]
  %s8 = sld [smem:[#allocation0]]
  $region38: #{multi_head_attention.1} parent=0
    _
  %s10 = ssub.s32 1, %s8
  %s11 = scalar_select 0, %s10, %s8
  // Predicated region
  $region2: #{multi_head_attention.1} parent=0 // pred_check
    _
  $region3: #{multi_head_attention.1} parent=0 // pred_check_branch
    %13 = sbr.rel (0) target = $region5
  $region4: #{multi_head_attention.1} parent=0 // pred_region
    _
  $region5: #{multi_head_attention.1} parent=0 // pred_fallthru
    _
  // Predicated region
  $region6: #{multi_head_attention.1} parent=0 // pred_check
    _
  $region7: #{multi_head_attention.1} parent=0 // pred_check_branch
    %15 = sbr.rel (0) target = $region9
  $region8: #{multi_head_attention.1} parent=0 // pred_region
    _
  $region9: #{multi_head_attention.1} parent=0 // pred_fallthru
    _
  // Predicated region
  $region10: #{multi_head_attention.1} parent=0 // pred_check
    _
  $region11: #{multi_head_attention.1} parent=0 // pred_check_branch
    %17 = sbr.rel (0) target = $region13
  $region12: #{multi_head_attention.1} parent=0 // pred_region
    _
  $region13: #{multi_head_attention.1} parent=0 // pred_fallthru
    _
  // Predicated region
  $region14: #{multi_head_attention.1} parent=0 // pred_check
    _
  $region15: #{multi_head_attention.1} parent=0 // pred_check_branch
    %19 = sbr.rel (0) target = $region17
  $region16: #{multi_head_attention.1} parent=0 // pred_region
    _
  $region17: #{multi_head_attention.1} parent=0 // pred_fallthru
    _
  // Predicated region
  $region18: #{multi_head_attention.1} parent=0 // pred_check
    _
  $region19: #{multi_head_attention.1} parent=0 // pred_check_branch
    %21 = sbr.rel (0) target = $region21
  $region20: #{multi_head_attention.1} parent=0 // pred_region
    _
  $region21: #{multi_head_attention.1} parent=0 // pred_fallthru
    _
  // Predicated region
  $region22: #{multi_head_attention.1} parent=0 // pred_check
    _
  $region23: #{multi_head_attention.1} parent=0 // pred_check_branch
    %23 = sbr.rel (0) target = $region25
  $region24: #{multi_head_attention.1} parent=0 // pred_region
    _
  $region25: #{multi_head_attention.1} parent=0 // pred_fallthru
    _
  // Predicated region
  $region26: #{multi_head_attention.1} parent=0 // pred_check
    _
  $region27: #{multi_head_attention.1} parent=0 // pred_check_branch
    %25 = sbr.rel (0) target = $region29
  $region28: #{multi_head_attention.1} parent=0 // pred_region
    _
  $region29: #{multi_head_attention.1} parent=0 // pred_fallthru
    _
  %v26 = vld [vmem:[%s0] sm:$0xff]
  %v27 = vld [vmem:[%s0 + $0x8] sm:$0xf]
  %v28 = vld [vmem:[%s2] sm:$0x7]
  %vm29 = vcmask 23552
  %v31 = vsel %vm29, %v26, 0
  %v34 = vsel %vm29, %v27, 0
  %vm36 = vcmask 1042432
  %v38 = vsel %vm36, %v28, 0
  %40 = vmatpush.msra.mxu0 0.0
  %41 = vmatpush.msra.mxu0 0.0
  %42 = vmatpush.msra.mxu0 0.0
  %43 = vmatpush.msra.mxu0 0.0
  %44 = vmatpush.msra.mxu0 0.0
  %45 = vmatpush.msra.mxu0 0.0
  %46 = vmatpush.msra.mxu0 0.0
  %47 = vmatpush.msra.mxu0 0.0
  %48 = vmatpush.msra.mxu0 0.0
  %49 = vmatpush.msra.mxu0 0.0
  %50 = vmatpush.msra.mxu0 0.0
  %51 = vmatpush.msra.mxu0 0.0
  %52 = vmatpush.msra.mxu0 0.0
  %53 = vmatpush.msra.mxu0 0.0
  %54 = vmatpush.msra.mxu0 0.0
  %55 = vmatpush.msra.mxu0 %v38
  %56 = vmatmul.f32.gmra.mxu0 %v31
  %v57 = vpop.f32.mrf.mxu0
  %v58 = vadd.f32 0.0, %v57
  %59 = vmatmul.f32.gmra.mxu0 %v34
  %v60 = vpop.f32.mrf.mxu0
  %v61 = vadd.f32 0.0, %v60
  %62 = vdwg.mxu0
  %v63 = vld [vmem:[%s3] sm:$0xf]
  %v64 = vld [vmem:[%s1] sm:$0x7]
  %v66 = vsel %vm29, %v63, 0
  %v69 = vsel %vm36, %v64, 0
  %71 = vmatpush.msra.mxu0 0.0
  %72 = vmatpush.msra.mxu0 0.0
  %73 = vmatpush.msra.mxu0 0.0
  %74 = vmatpush.msra.mxu0 0.0
  %75 = vmatpush.msra.mxu0 0.0
  %76 = vmatpush.msra.mxu0 0.0
  %77 = vmatpush.msra.mxu0 0.0
  %78 = vmatpush.msra.mxu0 0.0
  %79 = vmatpush.msra.mxu0 0.0
  %80 = vmatpush.msra.mxu0 0.0
  %81 = vmatpush.msra.mxu0 0.0
  %82 = vmatpush.msra.mxu0 0.0
  %83 = vmatpush.msra.mxu0 0.0
  %84 = vmatpush.msra.mxu0 0.0
  %85 = vmatpush.msra.mxu0 0.0
  %86 = vmatpush.msra.mxu0 %v69
  %87 = vmatmul.f32.gmra.mxu0 %v66
  %v88 = vpop.f32.mrf.mxu0
  %v89 = vadd.f32 0.0, %v88
  %90 = vdwg.mxu0
  %v91 = vld [vmem:[%s6] sm:$0xff]
  %v92 = vld [vmem:[%s6 + $0x8] sm:$0xf]
  %v93 = vld [vmem:[%s5] sm:$0x1]
  %95 = vset.pattern.permute.xlu0 0
  %96 = vperm.xlu0 %95, %v58
  %v97 = vpop.permute.xlu0 %96
  %100 = vset.pattern.permute.xlu0 0
  %101 = vperm.xlu0 %100, %v61
  %v102 = vpop.permute.xlu0 %101
  %v104 = vperm.slane %v89, 0
  %v105 = vmul.f32 %v97, %v104
  %v106 = vmul.f32 %v102, %v104
  %v107 = vadd.f32 %v105, %v91
  %v108 = vadd.f32 %v106, %v92
  %vm109 = vcmask 97280
  %v110 = vsel %vm109, %v107, -inf
  %111 = vmax.xlane.f32.xlu0 %v110
  %v112 = vpop.xlane.xlu0 %111
  %vm113 = vcmask 93184
  %v114 = vsel %vm113, %v108, -inf
  %115 = vmax.xlane.f32.xlu0 %v114
  %v116 = vpop.xlane.xlu0 %115
  %v117 = vsub.f32 %v107, %v112
  %v118 = vsub.f32 %v108, %v116
  %v119 = vmul.f32 %v117, 1.442695
  %v120 = vpow.pop %v119
  %v121 = vmul.f32 %v118, 1.442695
  %v122 = vpow.pop %v121
  %v123 = vsel %vm109, %v120, 0.0
  %124 = vadd.xlane.f32.xlu0 %v123
  %v125 = vpop.xlane.xlu0 %124
  %v126 = vsel %vm113, %v122, 0.0
  %127 = vadd.xlane.f32.xlu0 %v126
  %v128 = vpop.xlane.xlu0 %127
  %v129 = vrcp.pop %v125
  %v130 = vmul.f32 %v125, %v129
  %v131 = vsub.f32 1.0, %v130
  %v132 = vmul.f32 %v129, %v131
  %v133 = vadd.f32 %v129, %v132
  %vm134 = vweird.f32 %v125
  %vm135 = vweird.f32 %v129
  %vm136 = vmor %vm134, %vm135
  %v137 = vsel %vm136, %v129, %v133
  %v138 = vand.u32 2147483647, %v125
  %vm139 = vcmp.eq.f32.partialorder %v138, 8.507059e+37
  %v140 = vand.u32 %v125, 2147483648
  %v141 = vor.u32 1.1754944e-38, %v140
  %v142 = vsel %vm139, %v141, %v137
  %v143 = vmul.f32 %v120, %v142
  %v144 = vrcp.pop %v128
  %v145 = vmul.f32 %v128, %v144
  %v146 = vsub.f32 1.0, %v145
  %v147 = vmul.f32 %v144, %v146
  %v148 = vadd.f32 %v144, %v147
  %vm149 = vweird.f32 %v128
  %vm150 = vweird.f32 %v144
  %vm151 = vmor %vm149, %vm150
  %v152 = vsel %vm151, %v144, %v148
  %v153 = vand.u32 2147483647, %v128
  %vm154 = vcmp.eq.f32.partialorder %v153, 8.507059e+37
  %v155 = vand.u32 %v128, 2147483648
  %v156 = vor.u32 1.1754944e-38, %v155
  %v157 = vsel %vm154, %v156, %v152
  %v158 = vmul.f32 %v122, %v157
  %v159 = vperm.slane %v89, 2
  %v160 = vmul.f32 %v143, %v159
  %v161 = vmul.f32 %v158, %v159
  %v162 = vsel %vm109, %v160, 0.0
  %163 = vadd.xlane.f32.xlu0 %v162
  %v164 = vpop.xlane.xlu0 %163
  %v165 = vsel %vm113, %v161, 0.0
  %166 = vadd.xlane.f32.xlu0 %v165
  %v167 = vpop.xlane.xlu0 %166
  %v168 = vld [vmem:[%s4] sm:$0x1]
  %v169 = vperm.slane %v168, 0
  %v170 = vmul.f32 %v164, %v169
  %v171 = vmul.f32 %v167, %v169
  %v173 = vperm.slane %v93, 0
  %v175 = vadd.f32 %v173, %v170
  %v176 = vadd.f32 %v173, %v171
  %177 = vset.pattern.permute.xlu0 1
  %178 = vperm.xlu0 %177, %v58
  %v179 = vpop.permute.xlu0 %178
  %181 = vset.pattern.permute.xlu0 1
  %182 = vperm.xlu0 %181, %v61
  %v183 = vpop.permute.xlu0 %182
  %v185 = vperm.slane %v89, 1
  %v186 = vmul.f32 %v179, %v185
  %v187 = vmul.f32 %v183, %v185
  %v188 = vadd.f32 %v186, %v91
  %v189 = vadd.f32 %v187, %v92
  %v190 = vsel %vm109, %v188, -inf
  %191 = vmax.xlane.f32.xlu0 %v190
  %v192 = vpop.xlane.xlu0 %191
  %v193 = vsel %vm113, %v189, -inf
  %194 = vmax.xlane.f32.xlu0 %v193
  %v195 = vpop.xlane.xlu0 %194
  %v196 = vsub.f32 %v188, %v192
  %v197 = vsub.f32 %v189, %v195
  %v198 = vmul.f32 %v196, 1.442695
  %v199 = vpow.pop %v198
  %v200 = vmul.f32 %v197, 1.442695
  %v201 = vpow.pop %v200
  %v202 = vsel %vm109, %v199, 0.0
  %203 = vadd.xlane.f32.xlu0 %v202
  %v204 = vpop.xlane.xlu0 %203
  %v205 = vsel %vm113, %v201, 0.0
  %206 = vadd.xlane.f32.xlu0 %v205
  %v207 = vpop.xlane.xlu0 %206
  %v208 = vrcp.pop %v204
  %v209 = vmul.f32 %v204, %v208
  %v210 = vsub.f32 1.0, %v209
  %v211 = vmul.f32 %v208, %v210
  %v212 = vadd.f32 %v208, %v211
  %vm213 = vweird.f32 %v204
  %vm214 = vweird.f32 %v208
  %vm215 = vmor %vm213, %vm214
  %v216 = vsel %vm215, %v208, %v212
  %v217 = vand.u32 2147483647, %v204
  %vm218 = vcmp.eq.f32.partialorder %v217, 8.507059e+37
  %v219 = vand.u32 %v204, 2147483648
  %v220 = vor.u32 1.1754944e-38, %v219
  %v221 = vsel %vm218, %v220, %v216
  %v222 = vmul.f32 %v199, %v221
  %v223 = vrcp.pop %v207
  %v224 = vmul.f32 %v207, %v223
  %v225 = vsub.f32 1.0, %v224
  %v226 = vmul.f32 %v223, %v225
  %v227 = vadd.f32 %v223, %v226
  %vm228 = vweird.f32 %v207
  %vm229 = vweird.f32 %v223
  %vm230 = vmor %vm228, %vm229
  %v231 = vsel %vm230, %v223, %v227
  %v232 = vand.u32 2147483647, %v207
  %vm233 = vcmp.eq.f32.partialorder %v232, 8.507059e+37
  %v234 = vand.u32 %v207, 2147483648
  %v235 = vor.u32 1.1754944e-38, %v234
  %v236 = vsel %vm233, %v235, %v231
  %v237 = vmul.f32 %v201, %v236
  %v238 = vperm.slane %v89, 3
  %v239 = vmul.f32 %v222, %v238
  %v240 = vmul.f32 %v237, %v238
  %v241 = vsel %vm109, %v239, 0.0
  %242 = vadd.xlane.f32.xlu0 %v241
  %v243 = vpop.xlane.xlu0 %242
  %v244 = vsel %vm113, %v240, 0.0
  %245 = vadd.xlane.f32.xlu0 %v244
  %v246 = vpop.xlane.xlu0 %245
  %v247 = vld [vmem:[%s4 + $0x1] sm:$0x1]
  %v248 = vperm.slane %v247, 0
  %v249 = vmul.f32 %v243, %v248
  %v250 = vmul.f32 %v246, %v248
  %v251 = vadd.f32 %v175, %v249
  %v252 = vadd.f32 %v176, %v250
  %vm253 = vcmask 15360
  %254 = vst.msk [vmem:[%s7] sm:$0xff] %vm253, %v251
  %vm255 = vcmask 11264
  %256 = vst.msk [vmem:[%s7 + $0x8] sm:$0xf] %vm255, %v252
  // Predicated region
  $region30: #{multi_head_attention.1} parent=0 // pred_check
    _
  $region31: #{multi_head_attention.1} parent=0 // pred_check_branch
    %258 = sbr.rel (0) target = $region33
  $region32: #{multi_head_attention.1} parent=0 // pred_region
    _
  $region33: #{multi_head_attention.1} parent=0 // pred_fallthru
    _
  // Predicated region
  $region34: #{multi_head_attention.1} parent=0 // pred_check
    _
  $region35: #{multi_head_attention.1} parent=0 // pred_check_branch
    %260 = sbr.rel (0) target = $region37
  $region36: #{multi_head_attention.1} parent=0 // pred_region
    _
  $region37: #{multi_head_attention.1} parent=0 // pred_fallthru
    _

</llo_original>
